<compile_context>
chip_gen: v6e
topology: v6e:2x2x1
jax: 0.10.0
libtpu: 0.0.40
codegen_flags: <defaults>
</compile_context>

<pallas_src>
import jax
import jax.numpy as jnp
from jax.experimental import pallas as pl
from jax.experimental.pallas import tpu as pltpu


def _round_up(x: int, m: int) -> int:
    return ((x + m - 1) // m) * m


def _chomp_copy_kernel(x_ref, o_ref):
    # Identity tile copy; the truncation is expressed purely by the grid /
    # BlockSpecs (the output array simply has fewer columns than the input).
    o_ref[...] = x_ref[...]


def chomp1d(
    x: jax.Array,
    chomp_size: int,
    *,
    tile_bytes: int = 2 * 1024 * 1024,  # per-tile byte budget (dtype-agnostic)
) -> jax.Array:
    """Drop the last `chomp_size` elements along the last axis of (N, C, L)."""
    n, c, l = x.shape
    assert 1 <= chomp_size < l, "chomp_size must be in [1, L)"
    l_out = l - chomp_size

    rows = n * c
    x2d = x.reshape(rows, l)

    itemsize = jnp.dtype(x.dtype).itemsize
    # Sublane packing multiple: 8 for f32, 16 for bf16, 32 for int8/fp8.
    sub_mult = max(8, 32 // itemsize)

    rows_pad = _round_up(rows, sub_mult)
    l_pad = _round_up(l_out, 128)

    # --- Byte-budgeted tiles: grow the lane axis (bc) first. -------------
    # Widest 128-aligned bc that fits the budget with a minimal (sub_mult) row
    # count; ideally this covers all of l_pad and collapses the column grid
    # axis to 1 (longest contiguous DMA bursts, fewest descriptors).
    max_bc = max(128, ((tile_bytes // (sub_mult * itemsize)) // 128) * 128)
    bc = min(l_pad, max_bc)

    # Spend the remaining budget on rows.
    max_br = max(sub_mult, ((tile_bytes // (bc * itemsize)) // sub_mult) * sub_mult)
    br = min(rows_pad, max_br)

    # Megacore: guarantee >= 2 row blocks when rows allow it, so v7x's two
    # TensorCores both issue DMAs ("parallel" row axis shards across cores).
    if rows_pad > sub_mult:
        half_rows = _round_up(pl.cdiv(rows, 2), sub_mult)
        br = min(br, max(sub_mult, half_rows))

    grid = (pl.cdiv(rows, br), pl.cdiv(l_out, bc))

    # Double-buffered footprint: 2 x (in + out) tiles.  Set the scoped-VMEM
    # limit explicitly (with headroom) so larger tile budgets don't trip the
    # 16 MiB v5e default; cap at 48 MiB to stay under v7x's 64 MiB physical.
    tile_footprint = 4 * br * bc * itemsize
    vmem_limit = min(48 * 1024 * 1024,
                     max(16 * 1024 * 1024, tile_footprint + 4 * 1024 * 1024))

    cost = pl.CostEstimate(
        flops=0,
        transcendentals=0,
        bytes_accessed=2 * rows * l_out * itemsize,  # read + write of kept data
    )

    out2d = pl.pallas_call(
        _chomp_copy_kernel,
        out_shape=jax.ShapeDtypeStruct((rows, l_out), x.dtype),
        grid=grid,
        # Same block shape + same index_map for input and output: only the
        # first l_out (rounded) columns of the input are ever covered by the
        # grid; Pallas edge-clips partial blocks on both axes.
        in_specs=[pl.BlockSpec((br, bc), lambda i, j: (i, j))],
        out_specs=pl.BlockSpec((br, bc), lambda i, j: (i, j)),
        compiler_params=pltpu.CompilerParams(
            dimension_semantics=("parallel", "parallel"),
            vmem_limit_bytes=vmem_limit,
        ),
        cost_estimate=cost,
    )(x2d)

    return out2d.reshape(n, c, l_out)


if __name__ == "__main__":
    key = jax.random.PRNGKey(0)

    # Small demo shape consistent with the TCN module's (N, C, L) input.
    N, C, L = 2, 4, 16
    chomp_size = 3  # Chomp1d(chomp_size) — no learned parameters.

    x = jax.random.normal(key, (N, C, L), dtype=jnp.float32)
    y = chomp1d(x, chomp_size)
    jax.block_until_ready(y)

    y_ref = x[:, :, :-chomp_size]
    assert y.shape == (N, C, L - chomp_size), y.shape
    assert jnp.array_equal(y, y_ref), "mismatch vs reference slice (small case)"

    # Second check: rows not a multiple of 8 and l_out not a multiple of 128,
    # exercising partial (edge-clipped) blocks on both axes and >= 2 row
    # blocks (megacore path).
    key2 = jax.random.PRNGKey(0)
    N2, C2, L2, chomp2 = 3, 5, 300, 7
    x2 = jax.random.normal(key2, (N2, C2, L2), dtype=jnp.float32)
    y2 = chomp1d(x2, chomp2)
    jax.block_until_ready(y2)
    assert y2.shape == (N2, C2, L2 - chomp2), y2.shape
    assert jnp.array_equal(y2, x2[:, :, :-chomp2]), "mismatch (partial blocks)"

    # Third check: bf16 exercises the dtype-aware (byte-budgeted) tile sizing
    # and the 16-row sublane packing multiple.
    x3 = jax.random.normal(key, (N, C, L), dtype=jnp.float32).astype(jnp.bfloat16)
    y3 = chomp1d(x3, chomp_size)
    jax.block_until_ready(y3)
    assert y3.shape == (N, C, L - chomp_size), y3.shape
    assert jnp.array_equal(y3, x3[:, :, :-chomp_size]), "mismatch (bf16)"

    print("KERNEL_OK")
</pallas_src>

<mosaic_0001>
module attributes {stable_mosaic.version = 11 : i64} {
  func.func @_chomp_copy_kernel(%arg0: i32, %arg1: i32, %arg2: memref<8x128xf32, #tpu.memory_space<vmem>>, %arg3: memref<8x128xf32, #tpu.memory_space<vmem>>) attributes {dimension_semantics = [#tpu.dimension_semantics<parallel>, #tpu.dimension_semantics<parallel>], iteration_bounds = array<i64: 1, 1>, scalar_prefetch = 0 : i64, scratch_operands = 0 : i64, tpu.core_type = #tpu.core_type<tc>, window_params = [{transform_indices = @transform_0, window_bounds = array<i64: 8, 128>}, {transform_indices = @transform_1, window_bounds = array<i64: 8, 128>}]} {
    %c0 = arith.constant 0 : index
    %c0_0 = arith.constant 0 : index
    %0 = vector.load %arg2[%c0, %c0_0] : memref<8x128xf32, #tpu.memory_space<vmem>>, vector<8x128xf32>
    %c0_1 = arith.constant 0 : index
    %c0_2 = arith.constant 0 : index
    %1 = vector.load %arg3[%c0_1, %c0_2] : memref<8x128xf32, #tpu.memory_space<vmem>>, vector<8x128xf32>
    tpu.vector_store %arg3[%c0_1, %c0_2], %0 {strides = array<i32>} : memref<8x128xf32, #tpu.memory_space<vmem>>, vector<8x128xf32>,
    return
  }
  func.func @transform_0(%arg0: i32, %arg1: i32) -> (i32, i32) {
    %c0_i32 = arith.constant 0 : i32
    return %arg0, %arg1 : i32, i32
  }
  func.func @transform_1(%arg0: i32, %arg1: i32) -> (i32, i32) {
    %c0_i32 = arith.constant 0 : i32
    return %arg0, %arg1 : i32, i32
  }
}

</mosaic_0001>

<llo_original>
// kernel: tpu_custom_call.1
$region0: #{tpu_custom_call.1}
  #allocation0 [shape = 'u32[]', space=smem, size = 0x4, offset = 0x4, fixed_abs, tag = 'smem constant byte address 0x4 - core index']
  #allocation1 [shape = 'u32[144,128]{1,0:T(1,128)}', space=vmem, size = 0x12000, scoped, tag = 'internal scratch']
  %s0 = inlined_call_operand.hbm [shape: f32[8,16], index: 0, kind: input, shape index: {}]
  %s1 = inlined_call_operand.hbm [shape: f32[8,13], index: 1, kind: output, shape index: {}]
  %s2 = sld [smem:[#allocation0]]
  $region18: #{tpu_custom_call.1} parent=0
    _
  %s4 = ssub.s32 1, %s2
  %s5 = scalar_select 0, %s4, %s2
  $region1: #{tpu_custom_call.1} parent=0
    #allocation2 [shape = 'u8[4096]{0}', space=vmem, size = 0x1000, scoped, tag = 'input window, operand 0, single buffered']
    #allocation3 [shape = 's32[1]{0}', space=sflag, size = 0x4, scoped, tag = 'scoped memory for tpu_custom_call.1']
    #allocation4 [shape = 's32[1]{0}', space=sflag, size = 0x4, scoped, tag = 'scoped memory for tpu_custom_call.1']
    #allocation5 [shape = 'u8[4096]{0}', space=vmem, size = 0x1000, scoped, tag = 'output window, operand 0, single buffered']
    %6 = vsyncpa [#allocation3], 0
    %7 = vsyncpa [#allocation4], 0
    // Predicated region
    $region2: #{tpu_custom_call.1} parent=1 // pred_check
      _
    $region3: #{tpu_custom_call.1} parent=1 // pred_check_branch
      %9 = sbr.rel (0) target = $region5
    $region4: #{tpu_custom_call.1} parent=1 // pred_region
      %s11 = ssub.s32 128, 128
      %12 = vsyncadd [#allocation3], %s11
      %s14 = sshll.u32 [#allocation2], 4
      %s15 = int_to_ptr.vmem [resolvable:$true] %s14
      %17 = dma.hbm_to_vmem [thread:$0]  %s0, 128, %s15, [#allocation3]
    $region5: #{tpu_custom_call.1} parent=1 // pred_fallthru
      _
    // Predicated region
    $region6: #{tpu_custom_call.1} parent=1 // pred_check
      _
    $region7: #{tpu_custom_call.1} parent=1 // pred_check_branch
      %19 = sbr.rel (0) target = $region9
    $region8: #{tpu_custom_call.1} parent=1 // pred_region
      %20 = dma.done [#allocation3], 128
    $region9: #{tpu_custom_call.1} parent=1 // pred_fallthru
      _
    %v21 = vld [vmem:[#allocation2] sm:$0xff]
    %22 = vst [vmem:[#allocation5] sm:$0xff] %v21
    // Predicated region
    $region10: #{tpu_custom_call.1} parent=1 // pred_check
      _
    $region11: #{tpu_custom_call.1} parent=1 // pred_check_branch
      %24 = sbr.rel (0) target = $region13
    $region12: #{tpu_custom_call.1} parent=1 // pred_region
      %s26 = ssub.s32 128, 128
      %27 = vsyncadd [#allocation4], %s26
      %s29 = sshll.u32 [#allocation5], 4
      %s30 = int_to_ptr.vmem [resolvable:$true] %s29
      %32 = dma.vmem_to_hbm [thread:$0]  %s30, 128, %s1, [#allocation4]
    $region13: #{tpu_custom_call.1} parent=1 // pred_fallthru
      _
    // Predicated region
    $region14: #{tpu_custom_call.1} parent=1 // pred_check
      _
    $region15: #{tpu_custom_call.1} parent=1 // pred_check_branch
      %34 = sbr.rel (0) target = $region17
    $region16: #{tpu_custom_call.1} parent=1 // pred_region
      %35 = dma.done [#allocation4], 128
    $region17: #{tpu_custom_call.1} parent=1 // pred_fallthru
      _
    %36 = vsyncpa [#allocation3], 1
    %37 = vsyncpa [#allocation4], 1

</llo_original>
